<compile_context>
chip_gen: v7x
topology: tpu7x:2x2x1
jax: 0.10.0
libtpu: 0.0.40
codegen_flags: <defaults>
</compile_context>

<pallas_src>
import functools

import jax
import jax.numpy as jnp
from jax.experimental import pallas as pl
from jax.experimental.pallas import tpu as pltpu


def _round_up(x: int, m: int) -> int:
    return ((x + m - 1) // m) * m


def _vmem_plan():
    """Generation-aware (per-tile logits budget, scoped-VMEM limit)."""
    try:
        cap = int(pltpu.get_tpu_info().vmem_capacity_bytes)
    except Exception:
        cap = 64 * 1024 * 1024                      # conservative default (v7x-like)
    if cap >= 96 * 1024 * 1024:                     # v5e / v6e: 128 MiB physical VMEM
        return 16 * 1024 * 1024, 64 * 1024 * 1024
    return 8 * 1024 * 1024, 40 * 1024 * 1024        # v7x: 64 MiB physical VMEM


def _native_dtype_max_ok() -> bool:
    """bf16 VPU path exists on v6e/v7x but not v5e."""
    try:
        kind = jax.devices()[0].device_kind.lower()
    except Exception:
        return False
    return ("v6" in kind) or ("v7" in kind)


def _tile_plan(B: int, C: int, itemsize: int):
    """Pick (block_b, block_c, vmem_limit) so a double-buffered tile fits comfortably."""
    budget, vmem_limit = _vmem_plan()
    row_vmem = _round_up(C, 128) * itemsize         # lane-padded VMEM row footprint
    if _round_up(B, 8) * row_vmem <= budget:
        return B, C, vmem_limit                     # single batch tile, full classes
    bb = budget // row_vmem
    if bb >= 64:                                    # full-C tiles with decent row count
        bb = max(8, min((bb // 8) * 8, 1024))
        return bb, C, vmem_limit
    # Very large vocabulary: tile the class axis, online logsumexp in the kernel.
    block_b = B if B <= 256 else 256
    bc = budget // max(1, _round_up(block_b, 8) * itemsize)
    bc = max(128, (bc // 128) * 128)
    bc = min(bc, C)
    return block_b, bc, vmem_limit


def _cce_kernel(x_ref, tgt_ref, out_ref, m_sc, l_sc, w_sc, *,
                alpha, target_confidence, n_valid, n_classes,
                block_b, block_c, num_c_tiles, col_mask, max_native):
    i = pl.program_id(0)            # batch tile (parallel)
    j = pl.program_id(1)            # class tile (arbitrary, reduction axis)

    conf = target_confidence
    rest = (1.0 - target_confidence) / n_classes    # matches reference (/C, not /(C-1))

    @pl.when(j == 0)
    def _():
        m_sc[...] = jnp.full((block_b, 1), -jnp.inf, dtype=jnp.float32)
        l_sc[...] = jnp.zeros((block_b, 1), dtype=jnp.float32)
        w_sc[...] = jnp.zeros((block_b, 1), dtype=jnp.float32)

    x_raw = x_ref[...]                              # (block_b, block_c), native dtype
    x = x_raw.astype(jnp.float32)                   # all math in f32 (safe on every gen)

    # Global class ids of this tile (target hit + ragged-class-tile masking).
    col_ids = j * block_c + jax.lax.broadcasted_iota(jnp.int32, (block_b, block_c), 1)
    tgt = tgt_ref[...]                              # (block_b, 1) int32; assumed in [0, C)

    if col_mask:                                    # ragged last class tile
        valid = col_ids < n_classes
        x_lse = jnp.where(valid, x, -jnp.inf)       # excluded from logsumexp
        x_w = jnp.where(valid, x, 0.0)              # excluded from weighted sum
    else:
        x_lse = x
        x_w = x

    # Row max — on packed bf16 data when the VPU supports it (exact, half the vregs).
    if max_native and not col_mask:
        m_tile = jnp.max(x_raw, axis=1, keepdims=True).astype(jnp.float32)
    else:
        m_tile = jnp.max(x_lse, axis=1, keepdims=True)

    # Online logsumexp update (running m / l across class tiles).
    m_old = m_sc[...]
    m_new = jnp.maximum(m_old, m_tile)
    corr = jnp.exp(m_old - m_new)
    l_sc[...] = corr * l_sc[...] + jnp.sum(jnp.exp(x_lse - m_new), axis=1, keepdims=True)
    m_sc[...] = m_new

    # Fused soft-target weighted sum of raw logits: sum_c one_hot_c * x_c.
    w = jnp.where(col_ids == tgt, conf, rest)
    w_sc[...] = w_sc[...] + jnp.sum(w * x_w, axis=1, keepdims=True)

    @pl.when(j == num_c_tiles - 1)
    def _():
        lse = m_sc[...] + jnp.log(l_sc[...])        # full-row logsumexp
        # sum_c one_hot_c == 1 - rest  =>  loss_b = -alpha * (w.x - (1-rest)*lse)
        loss = (-alpha) * (w_sc[...] - (1.0 - rest) * lse)          # (block_b, 1)
        rows = i * block_b + jax.lax.broadcasted_iota(jnp.int32, (block_b, 1), 0)
        loss = jnp.where(rows < n_valid, loss, 0.0)                 # zero ragged pad rows
        out_ref[...] = loss.reshape(1, 1, block_b)                  # lane-dense store


def custom_cross_entropy(output, target, alpha: float = 1.0,
                         reduction: str = "mean",
                         target_confidence: float = 0.75,
                         block_b: int | None = None,
                         block_c: int | None = None):
    """output: (B, C) float logits (any float dtype), target: (B,) int class indices."""
    if reduction not in ("none", "mean", "sum"):
        raise NotImplementedError(f"Invalid reduction mode: {reduction}")

    B, C = output.shape
    itemsize = jnp.dtype(output.dtype).itemsize

    auto_bb, auto_bc, vmem_limit = _tile_plan(B, C, itemsize)
    if block_b is None:
        block_b = auto_bb
    if block_c is None:
        block_c = auto_bc
    # Sanitize user overrides so BlockSpec dims are (8,128)-aligned or full-extent.
    block_b = min(block_b, B)
    if block_b < B:
        block_b = max(8, (block_b // 8) * 8)
    block_c = min(block_c, C)
    if block_c < C:
        block_c = max(128, (block_c // 128) * 128)

    num_b_tiles = pl.cdiv(B, block_b)
    num_c_tiles = pl.cdiv(C, block_c)
    col_mask = (block_c < C) and (C % block_c != 0)
    max_native = (jnp.dtype(output.dtype) == jnp.dtype(jnp.bfloat16)) and _native_dtype_max_ok()

    tgt = target.astype(jnp.int32).reshape(B, 1)    # tiny; logits are NOT copied/padded

    kern = functools.partial(
        _cce_kernel,
        alpha=float(alpha),
        target_confidence=float(target_confidence),
        n_valid=B,
        n_classes=C,
        block_b=block_b,
        block_c=block_c,
        num_c_tiles=num_c_tiles,
        col_mask=col_mask,
        max_native=max_native,
    )

    per_row = pl.pallas_call(
        kern,
        out_shape=jax.ShapeDtypeStruct((num_b_tiles, 1, block_b), jnp.float32),
        grid=(num_b_tiles, num_c_tiles),
        in_specs=[
            pl.BlockSpec((block_b, block_c), lambda i, j: (i, j)),   # logits (native dtype)
            pl.BlockSpec((block_b, 1), lambda i, j: (i, 0)),         # target indices
        ],
        out_specs=pl.BlockSpec((1, 1, block_b), lambda i, j: (i, 0, 0)),
        scratch_shapes=[pltpu.VMEM((block_b, 1), jnp.float32)] * 3,  # m, l, weighted-sum
        compiler_params=pltpu.CompilerParams(
            dimension_semantics=("parallel", "arbitrary"),
            vmem_limit_bytes=vmem_limit,
        ),
    )(output, tgt)

    if reduction == "none":
        return per_row.reshape(-1)[:B]
    total = jnp.sum(per_row)        # padded rows contribute exactly 0
    if reduction == "sum":
        return total
    return total / B                # mean over the true batch size


def _reference(output, target, alpha=1.0, reduction="mean", target_confidence=0.75):
    """Pure-JAX reference mirroring the PyTorch implementation."""
    B, C = output.shape
    log_soft = jax.nn.log_softmax(output.astype(jnp.float32), axis=1)
    rest = (1.0 - target_confidence) / C
    one_hot = jnp.where(
        jnp.arange(C)[None, :] == target[:, None], target_confidence, rest
    ).astype(jnp.float32)
    loss_tmp = jnp.sum(one_hot * (-alpha * log_soft), axis=1)
    if reduction == "none":
        return loss_tmp
    if reduction == "mean":
        return jnp.mean(loss_tmp)
    return jnp.sum(loss_tmp)


if __name__ == "__main__":
    key = jax.random.PRNGKey(0)
    k1, k2, k3, k4, k5, k6 = jax.random.split(key, 6)

    # --- module-default shape: batch of 8, 10 classes ---
    B, C = 8, 10
    logits = jax.random.normal(k1, (B, C), dtype=jnp.float32)
    target = jax.random.randint(k2, (B,), 0, C)
    for red in ("mean", "sum", "none"):
        got = custom_cross_entropy(logits, target, 1.0, red, 0.75)
        jax.block_until_ready(got)
        want = _reference(logits, target, 1.0, red, 0.75)
        assert jnp.allclose(got, want, atol=1e-5, rtol=1e-5), (red, got, want)

    # --- ragged batch tiles, NO host-side padding (B=20, block_b=8 -> last tile ragged) ---
    B2, C2 = 20, 10
    logits2 = jax.random.normal(k3, (B2, C2), dtype=jnp.float32)
    target2 = jax.random.randint(k4, (B2,), 0, C2)
    for red in ("mean", "sum", "none"):
        got = custom_cross_entropy(logits2, target2, 0.5, red, 0.9, block_b=8)
        jax.block_until_ready(got)
        want = _reference(logits2, target2, 0.5, red, 0.9)
        assert jnp.allclose(got, want, atol=1e-5, rtol=1e-5), (red, got, want)

    # --- class-axis tiling with ragged last class tile (online logsumexp path) ---
    B3, C3 = 16, 300
    logits3 = jax.random.normal(k5, (B3, C3), dtype=jnp.float32)
    target3 = jax.random.randint(k6, (B3,), 0, C3)
    for red in ("mean", "none"):
        got = custom_cross_entropy(logits3, target3, 1.0, red, 0.75, block_b=8, block_c=128)
        jax.block_until_ready(got)
        want = _reference(logits3, target3, 1.0, red, 0.75)
        assert jnp.allclose(got, want, atol=1e-5, rtol=1e-5), (red, got, want)

    # --- bf16 logits go straight into the kernel (f32 math inside) ---
    logits_b = jax.random.normal(k1, (16, 128), dtype=jnp.bfloat16)
    target_b = jax.random.randint(k2, (16,), 0, 128)
    got_b = custom_cross_entropy(logits_b, target_b, reduction="mean")
    jax.block_until_ready(got_b)
    want_b = _reference(logits_b.astype(jnp.float32), target_b, reduction="mean")
    assert jnp.allclose(got_b, want_b, atol=2e-4, rtol=2e-4), (got_b, want_b)

    # TODO(synk): out-of-range targets silently fall back to the uniform `rest` term
    # (same as the fused form); add pl.debug_check if strict PyTorch-like erroring is wanted.
    print("KERNEL_OK")
</pallas_src>

<mosaic_0001>
module attributes {stable_mosaic.version = 11 : i64} {
  func.func @_cce_kernel(%arg0: i32, %arg1: i32, %arg2: memref<8x10xf32, #tpu.memory_space<vmem>>, %arg3: memref<8x1xi32, #tpu.memory_space<vmem>>, %arg4: memref<1x1x8xf32, #tpu.memory_space<vmem>>, %arg5: memref<8x1xf32, #tpu.memory_space<vmem>>, %arg6: memref<8x1xf32, #tpu.memory_space<vmem>>, %arg7: memref<8x1xf32, #tpu.memory_space<vmem>>) attributes {dimension_semantics = [#tpu.dimension_semantics<parallel>, #tpu.dimension_semantics<arbitrary>], iteration_bounds = array<i64: 1, 1>, scalar_prefetch = 0 : i64, scratch_operands = 3 : i64, tpu.core_type = #tpu.core_type<tc>, window_params = [{transform_indices = @transform_0, window_bounds = array<i64: 8, 10>}, {transform_indices = @transform_1, window_bounds = array<i64: 8, 1>}, {transform_indices = @transform_2, window_bounds = array<i64: 1, 1, 8>}]} {
    %c0_i32 = arith.constant 0 : i32
    %0 = arith.cmpi eq, %arg1, %c0_i32 : i32
    %1 = arith.extui %0 : i1 to i32
    %c0_i32_0 = arith.constant 0 : i32
    %2 = arith.cmpi ne, %1, %c0_i32_0 : i32
    scf.if %2 {
      %cst_22 = arith.constant 0xFF800000 : f32
      %39 = vector.broadcast %cst_22 : f32 to vector<8x1xf32>
      %c0_23 = arith.constant 0 : index
      %c0_24 = arith.constant 0 : index
      %40 = vector.load %arg5[%c0_23, %c0_24] : memref<8x1xf32, #tpu.memory_space<vmem>>, vector<8x1xf32>
      tpu.vector_store %arg5[%c0_23, %c0_24], %39 {strides = array<i32>} : memref<8x1xf32, #tpu.memory_space<vmem>>, vector<8x1xf32>,
      %cst_25 = arith.constant 0.000000e+00 : f32
      %41 = vector.broadcast %cst_25 : f32 to vector<8x1xf32>
      %c0_26 = arith.constant 0 : index
      %c0_27 = arith.constant 0 : index
      %42 = vector.load %arg6[%c0_26, %c0_27] : memref<8x1xf32, #tpu.memory_space<vmem>>, vector<8x1xf32>
      tpu.vector_store %arg6[%c0_26, %c0_27], %41 {strides = array<i32>} : memref<8x1xf32, #tpu.memory_space<vmem>>, vector<8x1xf32>,
      %cst_28 = arith.constant 0.000000e+00 : f32
      %43 = vector.broadcast %cst_28 : f32 to vector<8x1xf32>
      %c0_29 = arith.constant 0 : index
      %c0_30 = arith.constant 0 : index
      %44 = vector.load %arg7[%c0_29, %c0_30] : memref<8x1xf32, #tpu.memory_space<vmem>>, vector<8x1xf32>
      tpu.vector_store %arg7[%c0_29, %c0_30], %43 {strides = array<i32>} : memref<8x1xf32, #tpu.memory_space<vmem>>, vector<8x1xf32>,
    } else {
    }
    %c0 = arith.constant 0 : index
    %c0_1 = arith.constant 0 : index
    %3 = vector.load %arg2[%c0, %c0_1] : memref<8x10xf32, #tpu.memory_space<vmem>>, vector<8x10xf32>
    %c10_i32 = arith.constant 10 : i32
    %4 = arith.muli %arg1, %c10_i32 : i32
    %5 = tpu.iota {dimensions = array<i32: 1>} : vector<8x10xi32>
    %6 = vector.broadcast %4 : i32 to vector<8x10xi32>
    %7 = arith.addi %6, %5 : vector<8x10xi32>
    %c0_2 = arith.constant 0 : index
    %c0_3 = arith.constant 0 : index
    %8 = vector.load %arg3[%c0_2, %c0_3] : memref<8x1xi32, #tpu.memory_space<vmem>>, vector<8x1xi32>
    %cst = arith.constant dense<0xFF800000> : vector<8xf32>
    %9 = vector.multi_reduction <maximumf>, %3, %cst [1] : vector<8x10xf32> to vector<8xf32>
    %10 = vector.shape_cast %9 : vector<8xf32> to vector<8x1xf32>
    %c0_4 = arith.constant 0 : index
    %c0_5 = arith.constant 0 : index
    %11 = vector.load %arg5[%c0_4, %c0_5] : memref<8x1xf32, #tpu.memory_space<vmem>>, vector<8x1xf32>
    %12 = arith.maximumf %11, %10 : vector<8x1xf32>
    %13 = arith.subf %11, %12 : vector<8x1xf32>
    %14 = math.exp %13 : vector<8x1xf32>
    %c0_6 = arith.constant 0 : index
    %c0_7 = arith.constant 0 : index
    %15 = vector.load %arg6[%c0_6, %c0_7] : memref<8x1xf32, #tpu.memory_space<vmem>>, vector<8x1xf32>
    %16 = arith.mulf %14, %15 : vector<8x1xf32>
    %17 = vector.broadcast %12 : vector<8x1xf32> to vector<8x10xf32>
    %18 = arith.subf %3, %17 : vector<8x10xf32>
    %19 = math.exp %18 : vector<8x10xf32>
    %cst_8 = arith.constant dense<0.000000e+00> : vector<8xf32>
    %20 = vector.multi_reduction <add>, %19, %cst_8 [1] : vector<8x10xf32> to vector<8xf32>
    %21 = vector.shape_cast %20 : vector<8xf32> to vector<8x1xf32>
    %22 = arith.addf %16, %21 : vector<8x1xf32>
    %c0_9 = arith.constant 0 : index
    %c0_10 = arith.constant 0 : index
    %23 = vector.load %arg6[%c0_9, %c0_10] : memref<8x1xf32, #tpu.memory_space<vmem>>, vector<8x1xf32>
    tpu.vector_store %arg6[%c0_9, %c0_10], %22 {strides = array<i32>} : memref<8x1xf32, #tpu.memory_space<vmem>>, vector<8x1xf32>,
    %c0_11 = arith.constant 0 : index
    %c0_12 = arith.constant 0 : index
    %24 = vector.load %arg5[%c0_11, %c0_12] : memref<8x1xf32, #tpu.memory_space<vmem>>, vector<8x1xf32>
    tpu.vector_store %arg5[%c0_11, %c0_12], %12 {strides = array<i32>} : memref<8x1xf32, #tpu.memory_space<vmem>>, vector<8x1xf32>,
    %25 = vector.broadcast %8 : vector<8x1xi32> to vector<8x10xi32>
    %26 = arith.cmpi eq, %7, %25 : vector<8x10xi32>
    %cst_13 = arith.constant 7.500000e-01 : f32
    %cst_14 = arith.constant 2.500000e-02 : f32
    %27 = vector.broadcast %cst_13 : f32 to vector<8x10xf32>
    %28 = vector.broadcast %cst_14 : f32 to vector<8x10xf32>
    %29 = arith.select %26, %27, %28 : vector<8x10xi1>, vector<8x10xf32>
    %c0_15 = arith.constant 0 : index
    %c0_16 = arith.constant 0 : index
    %30 = vector.load %arg7[%c0_15, %c0_16] : memref<8x1xf32, #tpu.memory_space<vmem>>, vector<8x1xf32>
    %31 = arith.mulf %29, %3 : vector<8x10xf32>
    %cst_17 = arith.constant dense<0.000000e+00> : vector<8xf32>
    %32 = vector.multi_reduction <add>, %31, %cst_17 [1] : vector<8x10xf32> to vector<8xf32>
    %33 = vector.shape_cast %32 : vector<8xf32> to vector<8x1xf32>
    %34 = arith.addf %30, %33 : vector<8x1xf32>
    %c0_18 = arith.constant 0 : index
    %c0_19 = arith.constant 0 : index
    %35 = vector.load %arg7[%c0_18, %c0_19] : memref<8x1xf32, #tpu.memory_space<vmem>>, vector<8x1xf32>
    tpu.vector_store %arg7[%c0_18, %c0_19], %34 {strides = array<i32>} : memref<8x1xf32, #tpu.memory_space<vmem>>, vector<8x1xf32>,
    %c0_i32_20 = arith.constant 0 : i32
    %36 = arith.cmpi eq, %arg1, %c0_i32_20 : i32
    %37 = arith.extui %36 : i1 to i32
    %c0_i32_21 = arith.constant 0 : i32
    %38 = arith.cmpi ne, %37, %c0_i32_21 : i32
    scf.if %38 {
      %c0_22 = arith.constant 0 : index
      %c0_23 = arith.constant 0 : index
      %39 = vector.load %arg5[%c0_22, %c0_23] : memref<8x1xf32, #tpu.memory_space<vmem>>, vector<8x1xf32>
      %c0_24 = arith.constant 0 : index
      %c0_25 = arith.constant 0 : index
      %40 = vector.load %arg6[%c0_24, %c0_25] : memref<8x1xf32, #tpu.memory_space<vmem>>, vector<8x1xf32>
      %41 = math.log %40 : vector<8x1xf32>
      %42 = arith.addf %39, %41 : vector<8x1xf32>
      %c0_26 = arith.constant 0 : index
      %c0_27 = arith.constant 0 : index
      %43 = vector.load %arg7[%c0_26, %c0_27] : memref<8x1xf32, #tpu.memory_space<vmem>>, vector<8x1xf32>
      %cst_28 = arith.constant 9.750000e-01 : f32
      %44 = vector.broadcast %cst_28 : f32 to vector<8x1xf32>
      %45 = arith.mulf %44, %42 : vector<8x1xf32>
      %46 = arith.subf %43, %45 : vector<8x1xf32>
      %cst_29 = arith.constant -1.000000e+00 : f32
      %47 = vector.broadcast %cst_29 : f32 to vector<8x1xf32>
      %48 = arith.mulf %47, %46 : vector<8x1xf32>
      %c8_i32 = arith.constant 8 : i32
      %49 = arith.muli %arg0, %c8_i32 : i32
      %50 = tpu.iota {dimensions = array<i32: 0>} : vector<8x1xi32>
      %51 = vector.broadcast %49 : i32 to vector<8x1xi32>
      %52 = arith.addi %51, %50 : vector<8x1xi32>
      %c8_i32_30 = arith.constant 8 : i32
      %53 = vector.broadcast %c8_i32_30 : i32 to vector<8x1xi32>
      %54 = arith.cmpi slt, %52, %53 : vector<8x1xi32>
      %cst_31 = arith.constant 0.000000e+00 : f32
      %55 = vector.broadcast %cst_31 : f32 to vector<8x1xf32>
      %56 = arith.select %54, %48, %55 : vector<8x1xi1>, vector<8x1xf32>
      %57 = vector.shape_cast %56 : vector<8x1xf32> to vector<1x1x8xf32>
      %c0_32 = arith.constant 0 : index
      %c0_33 = arith.constant 0 : index
      %c0_34 = arith.constant 0 : index
      %58 = vector.load %arg4[%c0_32, %c0_33, %c0_34] : memref<1x1x8xf32, #tpu.memory_space<vmem>>, vector<1x1x8xf32>
      tpu.vector_store %arg4[%c0_32, %c0_33, %c0_34], %57 {strides = array<i32>} : memref<1x1x8xf32, #tpu.memory_space<vmem>>, vector<1x1x8xf32>,
    } else {
    }
    return
  }
  func.func @transform_0(%arg0: i32, %arg1: i32) -> (i32, i32) {
    %c0_i32 = arith.constant 0 : i32
    return %arg0, %arg1 : i32, i32
  }
  func.func @transform_1(%arg0: i32, %arg1: i32) -> (i32, i32) {
    %c0_i32 = arith.constant 0 : i32
    %c0_i32_0 = arith.constant 0 : i32
    return %arg0, %c0_i32 : i32, i32
  }
  func.func @transform_2(%arg0: i32, %arg1: i32) -> (i32, i32, i32) {
    %c0_i32 = arith.constant 0 : i32
    %c0_i32_0 = arith.constant 0 : i32
    %c0_i32_1 = arith.constant 0 : i32
    return %arg0, %c0_i32, %c0_i32_0 : i32, i32, i32
  }
}

</mosaic_0001>

<llo_original>
// kernel: tpu_custom_call.1
$region0: #{tpu_custom_call.1}
  #allocation0 [shape = 'u32[]', space=smem, size = 0x4, offset = 0x4, fixed_abs, tag = 'smem constant byte address 0x4 - core index']
  #allocation1 [shape = 'u32[144,128]{1,0:T(1,128)}', space=vmem, size = 0x12000, scoped, tag = 'internal scratch']
  #allocation2 [shape = 'f32[8,1]{1,0:T(8,128)}', space=vmem, size = 0x1000, scoped, tag = 'scratch operand']
  #allocation3 [shape = 'f32[8,1]{1,0:T(8,128)}', space=vmem, size = 0x1000, scoped, tag = 'scratch operand']
  #allocation4 [shape = 'f32[8,1]{1,0:T(8,128)}', space=vmem, size = 0x1000, scoped, tag = 'scratch operand']
  %s0 = inlined_call_operand.vmem [shape: f32[8,10], index: 0, kind: input, shape index: {}]
  %s1 = inlined_call_operand.vmem [shape: s32[8,1], index: 1, kind: input, shape index: {}]
  %s2 = inlined_call_operand.hbm [shape: f32[1,1,8], index: 2, kind: output, shape index: {}]
  %s3 = sld [smem:[#allocation0]]
  $region26: #{tpu_custom_call.1} parent=0
    _
  %s5 = ssub.s32 1, %s3
  %s6 = scalar_select 0, %s5, %s3
  $region1: #{tpu_custom_call.1} parent=0
    #allocation5 [shape = 'u8[512]{0}', space=vmem, size = 0x400, scoped, tag = 'output window, operand 0, single buffered']
    #allocation6 [shape = 's32[1]{0}', space=sflag, size = 0x4, scoped, tag = 'scoped memory for tpu_custom_call.1']
    %7 = vsyncpa [#allocation6], 0
    // Predicated region
    $region2: #{tpu_custom_call.1} parent=1 // pred_check
      _
    $region3: #{tpu_custom_call.1} parent=1 // pred_check_branch
      %9 = sbr.rel (0) target = $region5
    $region4: #{tpu_custom_call.1} parent=1 // pred_region
      _
    $region5: #{tpu_custom_call.1} parent=1 // pred_fallthru
      _
    // Predicated region
    $region6: #{tpu_custom_call.1} parent=1 // pred_check
      _
    $region7: #{tpu_custom_call.1} parent=1 // pred_check_branch
      %11 = sbr.rel (0) target = $region9
    $region8: #{tpu_custom_call.1} parent=1 // pred_region
      _
    $region9: #{tpu_custom_call.1} parent=1 // pred_fallthru
      _
    %p12 = scmp.eq.s32.totalorder 0, 0
    // Predicated region
    $region10: #{tpu_custom_call.1} parent=1 // pred_check
      %p13 = pneg %p12
    $region11: #{tpu_custom_call.1} parent=1 // pred_check_branch
      %15 = sbr.rel (%p13) target = $region13
    $region12: #{tpu_custom_call.1} parent=1 // pred_region
      %vm16 = vcmask 7168
      %17 = vst.msk [vmem:[#allocation2] sm:$0xff] %vm16, -inf
      %18 = vst.msk [vmem:[#allocation3] sm:$0xff] %vm16, 0.0
      %19 = vst.msk [vmem:[#allocation4] sm:$0xff] %vm16, 0.0
    $region13: #{tpu_custom_call.1} parent=1 // pred_fallthru
      _
    %v20 = vld [vmem:[%s0] sm:$0xff]
    %s21 = smul.u32 0, 10
    %v22 = vlaneseq
    %v23 = vand.u32 %v22, 127
    %v24 = vstv %s21
    %v25 = vadd.s32 %v24, %v23
    %v26 = vld [vmem:[%s1] sm:$0xff]
    %vm27 = vcmask 80896
    %v28 = vsel %vm27, %v20, -inf
    %29 = vmax.xlane.f32.xlu0 %v28
    %v30 = vpop.xlane.xlu0 %29
    %v31 = vld [vmem:[#allocation2] sm:$0xff]
    %v32 = vmax.f32 %v31, %v30
    %v33 = vsub.f32 %v31, %v32
    %v34 = vmul.f32 %v33, 1.442695
    %v35 = vpow.pop %v34
    %v36 = vld [vmem:[#allocation3] sm:$0xff]
    %v37 = vmul.f32 %v35, %v36
    %39 = vset.pattern.permute.xlu0 0
    %40 = vperm.xlu0 %39, %v32
    %v41 = vpop.permute.xlu0 %40
    %v43 = vsub.f32 %v20, %v41
    %v44 = vmul.f32 %v43, 1.442695
    %v45 = vpow.pop %v44
    %v46 = vsel %vm27, %v45, 0.0
    %47 = vadd.xlane.f32.xlu0 %v46
    %v48 = vpop.xlane.xlu0 %47
    %v49 = vadd.f32 %v37, %v48
    %vm50 = vcmask 7168
    %51 = vst.msk [vmem:[#allocation3] sm:$0xff] %vm50, %v49
    %52 = vst.msk [vmem:[#allocation2] sm:$0xff] %vm50, %v32
    %53 = vset.pattern.permute.xlu0 0
    %54 = vperm.xlu0 %53, %v26
    %v55 = vpop.permute.xlu0 %54
    %vm56 = vcmp.eq.s32.totalorder %v25, %v55
    %v57 = vsel %vm56, 0.75, 0.025
    %v58 = vld [vmem:[#allocation4] sm:$0xff]
    %v59 = vmul.f32 %v57, %v20
    %v60 = vsel %vm27, %v59, 0.0
    %61 = vadd.xlane.f32.xlu0 %v60
    %v62 = vpop.xlane.xlu0 %61
    %v63 = vadd.f32 %v58, %v62
    %64 = vst.msk [vmem:[#allocation4] sm:$0xff] %vm50, %v63
    // Predicated region
    $region14: #{tpu_custom_call.1} parent=1 // pred_check
      %p65 = pneg %p12
    $region15: #{tpu_custom_call.1} parent=1 // pred_check_branch
      %67 = sbr.rel (%p65) target = $region17
    $region16: #{tpu_custom_call.1} parent=1 // pred_region
      %v68 = vld [vmem:[#allocation2] sm:$0xff]
      %v69 = vld [vmem:[#allocation3] sm:$0xff]
      %v70 = vlog2.pop %v69
      %v71 = vmul.f32 %v70, 0.6931472
      %v72 = vadd.f32 %v68, %v71
      %v73 = vld [vmem:[#allocation4] sm:$0xff]
      %v74 = vmul.f32 %v72, 0.975
      %v75 = vsub.f32 %v73, %v74
      %v76 = vmul.f32 %v75, -1.0
      %s77 = smul.u32 0, 8
      %v78 = vlaneseq
      %v79 = vshrl.u32 %v78, 7
      %v80 = vstv %s77
      %v81 = vadd.s32 %v80, %v79
      %vm82 = vcmp.lt.s32.totalorder %v81, 8
      %v83 = vsel %vm82, %v76, 0.0
      %85 = vset.pattern.permute.xlu0 0
      %86 = vperm.xlu0 %85, %v83
      %v87 = vpop.permute.xlu0 %86
      %v88 = vlaneseq
      %v89 = vshrl.u32 %v88, 7
      %v90 = vsub.s32 %v23, %v89
      %v91 = vrot.slane %v87, %v90
      %vm93 = vcmask 57344
      %94 = vst.msk [vmem:[#allocation5] sm:$0x1] %vm93, %v91
    $region17: #{tpu_custom_call.1} parent=1 // pred_fallthru
      _
    // Predicated region
    $region18: #{tpu_custom_call.1} parent=1 // pred_check
      _
    $region19: #{tpu_custom_call.1} parent=1 // pred_check_branch
      %96 = sbr.rel (0) target = $region21
    $region20: #{tpu_custom_call.1} parent=1 // pred_region
      %s98 = ssub.s32 16, 16
      %99 = vsyncadd [#allocation6], %s98
      %s101 = sshll.u32 [#allocation5], 4
      %s102 = int_to_ptr.vmem [resolvable:$true] %s101
      %104 = dma.vmem_to_hbm [thread:$0]  %s102, 16, %s2, [#allocation6]
    $region21: #{tpu_custom_call.1} parent=1 // pred_fallthru
      _
    // Predicated region
    $region22: #{tpu_custom_call.1} parent=1 // pred_check
      _
    $region23: #{tpu_custom_call.1} parent=1 // pred_check_branch
      %106 = sbr.rel (0) target = $region25
    $region24: #{tpu_custom_call.1} parent=1 // pred_region
      %107 = dma.done [#allocation6], 16
    $region25: #{tpu_custom_call.1} parent=1 // pred_fallthru
      _
    %108 = vsyncpa [#allocation6], 1

</llo_original>
